<compile_context>
chip_gen: v7x
topology: tpu7x:2x2x1
jax: 0.10.0
libtpu: 0.0.40
codegen_flags: <defaults>
</compile_context>

<pallas_src>
import functools
import math

import jax
import jax.numpy as jnp
from jax.experimental import pallas as pl
from jax.experimental.pallas import tpu as pltpu

E4M3_MAX = 448.0
_FP8 = jnp.float8_e4m3fn


# ------------------------------ Pallas kernel ------------------------------ #

def _scaled_matmul_kernel(*refs, cast_dtype, has_scale, has_bias):
    """Tiled out = (x @ wt) [* scale] [+ bias], f32 accumulation on the MXU.

    grid = (M//tm, N//tn, K//tk); K (reduction) is the last ("arbitrary") axis.
    Ref order: [scale (1,) f32 SMEM]?  x (tm,tk)  wt (tk,tn)  [bias (1,tn) f32]?
               out (tm,tn)  acc (tm,tn) f32 VMEM scratch.
    cast_dtype: None -> operands go to the MXU as-is (native fp8 on v7x, or
    bf16/f32 fallback operands); else per-tile VPU upcast (fp8->bf16 on
    v5e/v6e, hidden under the MXU-bound matmul).
    """
    idx = 0
    scale_ref = None
    if has_scale:
        scale_ref = refs[idx]
        idx += 1
    x_ref = refs[idx]
    wt_ref = refs[idx + 1]
    idx += 2
    b_ref = None
    if has_bias:
        b_ref = refs[idx]
        idx += 1
    o_ref, acc_ref = refs[idx], refs[idx + 1]

    k = pl.program_id(2)

    @pl.when(k == 0)
    def _init():
        acc_ref[...] = jnp.zeros_like(acc_ref)

    a = x_ref[...]
    b = wt_ref[...]
    if cast_dtype is not None:
        a = a.astype(cast_dtype)
        b = b.astype(cast_dtype)
    acc_ref[...] += jnp.dot(a, b, preferred_element_type=jnp.float32)

    # Scale + bias applied exactly once, in f32, with a single cast at store.
    @pl.when(k == pl.num_programs(2) - 1)
    def _finalize():
        out = acc_ref[...]
        if has_scale:
            out = out * scale_ref[0]
        if has_bias:
            out = out + b_ref[...]
        o_ref[...] = out.astype(o_ref.dtype)


# --------------------------- tiling / padding ------------------------------ #

def _round_up(x, m):
    return ((x + m - 1) // m) * m


def _pick_div_tile(dim, preferred, align):
    """For dim > preferred: largest multiple of `align` <= preferred that divides
    dim (searched down to preferred//4); else `preferred` (caller zero-pads dim
    up to a tile multiple).  Never returns the full dimension -> accumulator /
    operand VMEM stays bounded by the preferred tile."""
    t = max(align, (preferred // align) * align)
    lo = max(align, (t // 4) // align * align)
    for cand in range(t, lo - 1, -align):
        if dim % cand == 0:
            return cand
    return t


def _scaled_mm_pallas(x_op, wt_op, scale, bias_2d, out_dtype, *, mxu_fp8=False,
                      tm=512, tn=1024, tk=1024):
    """out[M, N] = (x_op @ wt_op) [* scale] [+ bias_2d], f32 accumulation.

    Default tiles (512, 1024, 1024): ~7 MiB (fp8 operands) / ~10 MiB (bf16)
    double-buffered VMEM -> MXU-bound K loop on all of v5e/v6e/v7x, well under
    the explicit 32 MiB scoped-VMEM limit set below.
    """
    M, K = x_op.shape
    K2, N = wt_op.shape
    assert K == K2

    # Tiles are capped at (tm, tn, tk); awkward dims are zero-padded up to a
    # tile multiple (output sliced back) rather than using a full-dimension
    # block.  N is always padded to a multiple of 128 for lane-dense stores.
    tm_ = M if M <= tm else _pick_div_tile(M, tm, 128)
    tn_ = min(_round_up(N, 128), tn) if N <= tn else _pick_div_tile(N, tn, 128)
    tk_ = K if K <= tk else _pick_div_tile(K, tk, 128)
    Mp, Kp, Np = _round_up(M, tm_), _round_up(K, tk_), _round_up(N, tn_)
    if (Mp, Kp) != (M, K):
        x_op = jnp.pad(x_op, ((0, Mp - M), (0, Kp - K)))
    if (Kp, Np) != (K, N):
        wt_op = jnp.pad(wt_op, ((0, Kp - K), (0, Np - N)))
    if bias_2d is not None and Np != N:
        bias_2d = jnp.pad(bias_2d, ((0, 0), (0, Np - N)))

    has_scale = scale is not None
    has_bias = bias_2d is not None
    # Native fp8 MXU feed when supported (v7x); otherwise per-tile bf16 upcast.
    cast_dtype = jnp.bfloat16 if (x_op.dtype == _FP8 and not mxu_fp8) else None

    grid = (Mp // tm_, Np // tn_, Kp // tk_)

    in_specs = []
    operands = []
    if has_scale:
        in_specs.append(pl.BlockSpec(memory_space=pltpu.MemorySpace.SMEM))
        operands.append(scale)
    in_specs += [
        pl.BlockSpec((tm_, tk_), lambda i, j, k: (i, k)),   # x tile
        pl.BlockSpec((tk_, tn_), lambda i, j, k: (k, j)),   # weight.T tile
    ]
    operands += [x_op, wt_op]
    if has_bias:
        in_specs.append(pl.BlockSpec((1, tn_), lambda i, j, k: (0, j)))
        operands.append(bias_2d)

    kernel = functools.partial(_scaled_matmul_kernel, cast_dtype=cast_dtype,
                               has_scale=has_scale, has_bias=has_bias)

    out = pl.pallas_call(
        kernel,
        out_shape=jax.ShapeDtypeStruct((Mp, Np), out_dtype),
        grid=grid,
        in_specs=in_specs,
        out_specs=pl.BlockSpec((tm_, tn_), lambda i, j, k: (i, j)),
        scratch_shapes=[pltpu.VMEM((tm_, tn_), jnp.float32)],
        compiler_params=pltpu.CompilerParams(
            dimension_semantics=("parallel", "parallel", "arbitrary"),
            vmem_limit_bytes=32 * 1024 * 1024),
    )(*operands)

    if (Mp, Np) != (M, N):
        out = out[:M, :N]
    return out


# ------------------------------- JAX glue ---------------------------------- #

def fp8_valid_shape_check(shape):
    return shape[0] % 16 == 0 and shape[1] % 16 == 0


def quantize_tensorwise_e4m3(x):
    """scale = E4M3_MAX / amax(|x|); fp8 = round(x * scale); return (fp8, 1/scale)."""
    xf = x.astype(jnp.float32)
    amax = jnp.maximum(jnp.max(jnp.abs(xf)), 1e-12)
    scale = E4M3_MAX / amax
    xq = jnp.clip(xf * scale, -E4M3_MAX, E4M3_MAX).astype(_FP8)
    inv_scale = (1.0 / scale).astype(jnp.float32)
    return xq, inv_scale


@functools.cache
def _kernel_supports_fp8_operands():
    """One-time probe: can Mosaic load fp8 VMEM operands and upcast in-kernel?"""
    def _probe(x_ref, o_ref):
        o_ref[...] = x_ref[...].astype(jnp.bfloat16)
    try:
        x = jnp.zeros((32, 128), _FP8)
        jax.block_until_ready(pl.pallas_call(
            _probe, out_shape=jax.ShapeDtypeStruct((32, 128), jnp.bfloat16))(x))
        return True
    except Exception:
        return False


@functools.cache
def _mxu_supports_fp8():
    """One-time probe: native fp8 x fp8 -> f32 MXU matmul (v7x)."""
    def _probe(a_ref, b_ref, o_ref):
        o_ref[...] = jnp.dot(a_ref[...], b_ref[...],
                             preferred_element_type=jnp.float32)
    try:
        a = jnp.zeros((32, 128), _FP8)
        b = jnp.zeros((128, 128), _FP8)
        jax.block_until_ready(pl.pallas_call(
            _probe, out_shape=jax.ShapeDtypeStruct((32, 128), jnp.float32))(a, b))
        return True
    except Exception:
        return False


@functools.partial(jax.jit, static_argnames=("mxu_fp8",))
def _fp8_forward(x, wt_op, w_inv, bias_2d, *, mxu_fp8):
    """fp8 path: quantize activation, scaled matmul, slice/reshape — all fused
    under jit so the amax/scale/cast costs one read+write of x, not several."""
    x2d = x.reshape(-1, x.shape[-1])                              # (M, K)
    q_x, x_inv = quantize_tensorwise_e4m3(x2d)
    scale = (x_inv * w_inv).reshape(1)                            # folded scale
    # If the cached weight is bf16 (fp8 VMEM unsupported), match it losslessly.
    x_op = q_x if wt_op.dtype == _FP8 else q_x.astype(wt_op.dtype)
    out = _scaled_mm_pallas(x_op, wt_op, scale, bias_2d, x.dtype,
                            mxu_fp8=mxu_fp8)
    return out.reshape(*x.shape[:-1], out.shape[-1])


@jax.jit
def _plain_forward(x, wt, bias_2d):
    """Non-fp8 fallback: same tiled kernel, no scale, operands in input dtype."""
    x2d = x.reshape(-1, x.shape[-1])
    out = _scaled_mm_pallas(x2d, wt.astype(x2d.dtype), None, bias_2d, x.dtype)
    return out.reshape(*x.shape[:-1], out.shape[-1])


class ScaledLinear:
    """JAX/Pallas re-implementation of atorch ScaledLinear forward (tensorwise fp8)."""

    def __init__(self, in_features, out_features, bias=True, dtype=jnp.bfloat16,
                 key=jax.random.PRNGKey(0), use_fp8=True):
        self.in_features = in_features
        self.out_features = out_features
        self.use_fp8 = use_fp8
        kw, kb = jax.random.split(key)
        # kaiming_uniform_(a=sqrt(5)) => bound = 1/sqrt(fan_in)
        bound = 1.0 / math.sqrt(in_features)
        self.weight = jax.random.uniform(
            kw, (out_features, in_features), jnp.float32, -bound, bound).astype(dtype)
        if bias:
            self.bias = jax.random.uniform(
                kb, (out_features,), jnp.float32, -bound, bound).astype(dtype)
            self._bias_2d = self.bias.astype(jnp.float32).reshape(1, -1)
        else:
            self.bias = None
            self._bias_2d = None
        # Matches the torch module: (in_features, out_features) %16 check here,
        # (M, K) of the flattened input checked per forward call.
        self.fp8_valid = fp8_valid_shape_check((in_features, out_features))
        self._wt_plain = None          # lazy (K, N) cache for the non-fp8 fallback
        self.wt_op = None
        self.w_inv = None
        self._mxu_fp8 = False
        if self.fp8_valid and use_fp8:
            # Weight quantized ONCE, pre-transposed to (K, N) fp8 + inverse scale:
            # no per-forward transpose / re-quantization / cast.
            wt_q, self.w_inv = quantize_tensorwise_e4m3(self.weight.T)
            if _kernel_supports_fp8_operands():
                self.wt_op = wt_q                       # 1 B/elem operand HBM traffic
                self._mxu_fp8 = _mxu_supports_fp8()     # native fp8 MXU feed on v7x
            else:
                # Lossless (e4m3 ⊂ bf16), cached once instead of per-forward.
                self.wt_op = wt_q.astype(jnp.bfloat16)

    def _plain_wt(self):
        if self._wt_plain is None:
            self._wt_plain = jnp.asarray(self.weight.T)   # cached (K, N)
        return self._wt_plain

    def __call__(self, x):
        m = math.prod(x.shape[:-1])
        fp8_ok = (self.use_fp8 and self.fp8_valid
                  and fp8_valid_shape_check((m, x.shape[-1])))
        if fp8_ok:
            return _fp8_forward(x, self.wt_op, self.w_inv, self._bias_2d,
                                mxu_fp8=self._mxu_fp8)
        return _plain_forward(x, self._plain_wt(), self._bias_2d)


# --------------------------------- main ------------------------------------ #

if __name__ == "__main__":
    key = jax.random.PRNGKey(0)
    k_x, k_p, k_x2, k_p2, k_x3 = jax.random.split(key, 5)

    # Test 1: small shapes, bias.  M=16, K=32, N=64 (N padded to 128 in-kernel).
    batch, seq, in_features, out_features = 2, 8, 32, 64
    x = jax.random.normal(k_x, (batch, seq, in_features), jnp.float32).astype(jnp.bfloat16)
    layer = ScaledLinear(in_features, out_features, bias=True,
                         dtype=jnp.bfloat16, key=k_p)

    out = jax.block_until_ready(layer(x))
    assert out.shape == (batch, seq, out_features), out.shape
    assert out.dtype == jnp.bfloat16, out.dtype

    fp8_x, x_inv = quantize_tensorwise_e4m3(x.reshape(-1, in_features))
    fp8_wt, w_inv = quantize_tensorwise_e4m3(layer.weight.T)
    ref = (fp8_x.astype(jnp.float32) @ fp8_wt.astype(jnp.float32)) * (x_inv * w_inv) \
          + layer.bias.astype(jnp.float32)[None, :]
    ref = ref.astype(jnp.bfloat16).reshape(batch, seq, out_features)
    err = jnp.max(jnp.abs(out.astype(jnp.float32) - ref.astype(jnp.float32)))
    assert float(err) < 1e-1, f"mismatch {err}"

    # Test 2: no bias, K=2048 -> exercises the K-tiled accumulator epilogue
    # (grid K extent = 2 at tk=1024).
    in2, out2 = 2048, 128
    x2 = jax.random.normal(k_x2, (batch, seq, in2), jnp.float32).astype(jnp.bfloat16)
    layer2 = ScaledLinear(in2, out2, bias=False, dtype=jnp.bfloat16, key=k_p2)

    o2 = jax.block_until_ready(layer2(x2))
    assert o2.shape == (batch, seq, out2), o2.shape

    fp8_x2, x_inv2 = quantize_tensorwise_e4m3(x2.reshape(-1, in2))
    fp8_wt2, w_inv2 = quantize_tensorwise_e4m3(layer2.weight.T)
    ref2 = (fp8_x2.astype(jnp.float32) @ fp8_wt2.astype(jnp.float32)) * (x_inv2 * w_inv2)
    ref2 = ref2.astype(jnp.bfloat16).reshape(batch, seq, out2)
    err2 = jnp.max(jnp.abs(o2.astype(jnp.float32) - ref2.astype(jnp.float32)))
    assert float(err2) < 5e-2, f"mismatch {err2}"

    # Test 3: M=14 (not %16) -> plain-mm fallback path (no scale, cached weight.T).
    x3 = jax.random.normal(k_x3, (2, 7, in_features), jnp.float32).astype(jnp.bfloat16)
    o3 = jax.block_until_ready(layer(x3))
    assert o3.shape == (2, 7, out_features), o3.shape
    ref3 = (x3.reshape(-1, in_features).astype(jnp.float32)
            @ layer.weight.T.astype(jnp.float32)
            + layer.bias.astype(jnp.float32)[None, :])
    ref3 = ref3.astype(jnp.bfloat16).reshape(2, 7, out_features)
    err3 = jnp.max(jnp.abs(o3.astype(jnp.float32) - ref3.astype(jnp.float32)))
    assert float(err3) < 2e-2, f"mismatch {err3}"

    print("KERNEL_OK")
</pallas_src>

<mosaic_0001>
module attributes {stable_mosaic.version = 11 : i64} {
  func.func @_probe(%arg0: memref<32x128xf8E4M3FN, #tpu.memory_space<vmem>>, %arg1: memref<32x128xbf16, #tpu.memory_space<vmem>>) attributes {dimension_semantics = [], scalar_prefetch = 0 : i64, scratch_operands = 0 : i64, tpu.core_type = #tpu.core_type<tc>} {
    %c0 = arith.constant 0 : index
    %c0_0 = arith.constant 0 : index
    %0 = vector.load %arg0[%c0, %c0_0] : memref<32x128xf8E4M3FN, #tpu.memory_space<vmem>>, vector<32x128xf8E4M3FN>
    %1 = arith.extf %0 : vector<32x128xf8E4M3FN> to vector<32x128xbf16>
    %c0_1 = arith.constant 0 : index
    %c0_2 = arith.constant 0 : index
    %2 = vector.load %arg1[%c0_1, %c0_2] : memref<32x128xbf16, #tpu.memory_space<vmem>>, vector<32x128xbf16>
    tpu.vector_store %arg1[%c0_1, %c0_2], %1 {strides = array<i32>} : memref<32x128xbf16, #tpu.memory_space<vmem>>, vector<32x128xbf16>,
    return
  }
}

module attributes {stable_mosaic.version = 11 : i64} {
  func.func @_scaled_matmul_kernel(%arg0: i32, %arg1: i32, %arg2: i32, %arg3: memref<1xf32, #tpu.memory_space<smem>>, %arg4: memref<16x32xbf16, #tpu.memory_space<vmem>>, %arg5: memref<32x128xbf16, #tpu.memory_space<vmem>>, %arg6: memref<1x128xf32, #tpu.memory_space<vmem>>, %arg7: memref<16x128xbf16, #tpu.memory_space<vmem>>, %arg8: memref<16x128xf32, #tpu.memory_space<vmem>>) attributes {dimension_semantics = [#tpu.dimension_semantics<parallel>, #tpu.dimension_semantics<parallel>, #tpu.dimension_semantics<arbitrary>], iteration_bounds = array<i64: 1, 1, 1>, scalar_prefetch = 0 : i64, scratch_operands = 1 : i64, tpu.core_type = #tpu.core_type<tc>, window_params = [{transform_indices = @transform_0, window_bounds = array<i64: 1>}, {transform_indices = @transform_1, window_bounds = array<i64: 16, 32>}, {transform_indices = @transform_2, window_bounds = array<i64: 32, 128>}, {transform_indices = @transform_3, window_bounds = array<i64: 1, 128>}, {transform_indices = @transform_4, window_bounds = array<i64: 16, 128>}]} {
    %c0_i32 = arith.constant 0 : i32
    %0 = arith.cmpi eq, %arg2, %c0_i32 : i32
    %1 = arith.extui %0 : i1 to i32
    %c0_i32_0 = arith.constant 0 : i32
    %2 = arith.cmpi ne, %1, %c0_i32_0 : i32
    scf.if %2 {
      %cst_10 = arith.constant 0.000000e+00 : f32
      %12 = vector.broadcast %cst_10 : f32 to vector<16x128xf32>
      %c0_11 = arith.constant 0 : index
      %c0_12 = arith.constant 0 : index
      %13 = vector.load %arg8[%c0_11, %c0_12] : memref<16x128xf32, #tpu.memory_space<vmem>>, vector<16x128xf32>
      tpu.vector_store %arg8[%c0_11, %c0_12], %12 {strides = array<i32>} : memref<16x128xf32, #tpu.memory_space<vmem>>, vector<16x128xf32>,
    } else {
    }
    %c0 = arith.constant 0 : index
    %c0_1 = arith.constant 0 : index
    %3 = vector.load %arg4[%c0, %c0_1] : memref<16x32xbf16, #tpu.memory_space<vmem>>, vector<16x32xbf16>
    %c0_2 = arith.constant 0 : index
    %c0_3 = arith.constant 0 : index
    %4 = vector.load %arg5[%c0_2, %c0_3] : memref<32x128xbf16, #tpu.memory_space<vmem>>, vector<32x128xbf16>
    %c0_4 = arith.constant 0 : index
    %c0_5 = arith.constant 0 : index
    %5 = vector.load %arg8[%c0_4, %c0_5] : memref<16x128xf32, #tpu.memory_space<vmem>>, vector<16x128xf32>
    %cst = arith.constant dense<0.000000e+00> : vector<16x128xf32>
    %6 = tpu.matmul %3, %4, %cst {dimension_numbers = #tpu.dot_dimension_numbers<[1], [0], [0], [1], [0, 0, 1, 1], [], []>} : vector<16x32xbf16>, vector<32x128xbf16>, vector<16x128xf32> -> vector<16x128xf32>
    %7 = arith.addf %5, %6 : vector<16x128xf32>
    %c0_6 = arith.constant 0 : index
    %c0_7 = arith.constant 0 : index
    %8 = vector.load %arg8[%c0_6, %c0_7] : memref<16x128xf32, #tpu.memory_space<vmem>>, vector<16x128xf32>
    tpu.vector_store %arg8[%c0_6, %c0_7], %7 {strides = array<i32>} : memref<16x128xf32, #tpu.memory_space<vmem>>, vector<16x128xf32>,
    %c0_i32_8 = arith.constant 0 : i32
    %9 = arith.cmpi eq, %arg2, %c0_i32_8 : i32
    %10 = arith.extui %9 : i1 to i32
    %c0_i32_9 = arith.constant 0 : i32
    %11 = arith.cmpi ne, %10, %c0_i32_9 : i32
    scf.if %11 {
      %c0_10 = arith.constant 0 : index
      %c0_11 = arith.constant 0 : index
      %12 = vector.load %arg8[%c0_10, %c0_11] : memref<16x128xf32, #tpu.memory_space<vmem>>, vector<16x128xf32>
      %c0_12 = arith.constant 0 : index
      %13 = memref.load %arg3[%c0_12] : memref<1xf32, #tpu.memory_space<smem>>
      %14 = vector.broadcast %13 : f32 to vector<16x128xf32>
      %15 = arith.mulf %12, %14 : vector<16x128xf32>
      %c0_13 = arith.constant 0 : index
      %c0_14 = arith.constant 0 : index
      %16 = vector.load %arg6[%c0_13, %c0_14] : memref<1x128xf32, #tpu.memory_space<vmem>>, vector<1x128xf32>
      %17 = vector.broadcast %16 : vector<1x128xf32> to vector<16x128xf32>
      %18 = arith.addf %15, %17 : vector<16x128xf32>
      %19 = arith.truncf %18 : vector<16x128xf32> to vector<16x128xbf16>
      %c0_15 = arith.constant 0 : index
      %c0_16 = arith.constant 0 : index
      %20 = vector.load %arg7[%c0_15, %c0_16] : memref<16x128xbf16, #tpu.memory_space<vmem>>, vector<16x128xbf16>
      tpu.vector_store %arg7[%c0_15, %c0_16], %19 {strides = array<i32>} : memref<16x128xbf16, #tpu.memory_space<vmem>>, vector<16x128xbf16>,
    } else {
    }
    return
  }
  func.func @transform_0(%arg0: i32, %arg1: i32, %arg2: i32) -> i32 {
    %c0_i32 = arith.constant 0 : i32
    %c0_i32_0 = arith.constant 0 : i32
    return %c0_i32 : i32
  }
  func.func @transform_1(%arg0: i32, %arg1: i32, %arg2: i32) -> (i32, i32) {
    %c0_i32 = arith.constant 0 : i32
    return %arg0, %arg2 : i32, i32
  }
  func.func @transform_2(%arg0: i32, %arg1: i32, %arg2: i32) -> (i32, i32) {
    %c0_i32 = arith.constant 0 : i32
    return %arg2, %arg1 : i32, i32
  }
  func.func @transform_3(%arg0: i32, %arg1: i32, %arg2: i32) -> (i32, i32) {
    %c0_i32 = arith.constant 0 : i32
    %c0_i32_0 = arith.constant 0 : i32
    return %c0_i32, %arg1 : i32, i32
  }
  func.func @transform_4(%arg0: i32, %arg1: i32, %arg2: i32) -> (i32, i32) {
    %c0_i32 = arith.constant 0 : i32
    return %arg0, %arg1 : i32, i32
  }
}

</mosaic_0001>

<llo_original>
// kernel: tpu_custom_call.1
$region0: #{tpu_custom_call.1}
  #allocation0 [shape = 'u32[]', space=smem, size = 0x4, offset = 0x4, fixed_abs, tag = 'smem constant byte address 0x4 - core index']
  #allocation1 [shape = 'u32[144,128]{1,0:T(1,128)}', space=vmem, size = 0x12000, scoped, tag = 'internal scratch']
  %s0 = inlined_call_operand.hbm [shape: f8e4m3fn[32,128], index: 0, kind: input, shape index: {}]
  %s1 = inlined_call_operand.hbm [shape: bf16[32,128], index: 1, kind: output, shape index: {}]
  %s2 = sld [smem:[#allocation0]]
  $region18: #{tpu_custom_call.1} parent=0
    _
  %s4 = ssub.s32 1, %s2
  %s5 = scalar_select 0, %s4, %s2
  $region1: #{tpu_custom_call.1} parent=0
    #allocation2 [shape = 'u8[4096]{0}', space=vmem, size = 0x1000, scoped, tag = 'input window, operand 0, single buffered']
    #allocation3 [shape = 's32[1]{0}', space=sflag, size = 0x4, scoped, tag = 'scoped memory for tpu_custom_call.1']
    #allocation4 [shape = 's32[1]{0}', space=sflag, size = 0x4, scoped, tag = 'scoped memory for tpu_custom_call.1']
    #allocation5 [shape = 'u8[8192]{0}', space=vmem, size = 0x2000, scoped, tag = 'output window, operand 0, single buffered']
    %6 = vsyncpa [#allocation3], 0
    %7 = vsyncpa [#allocation4], 0
    // Predicated region
    $region2: #{tpu_custom_call.1} parent=1 // pred_check
      _
    $region3: #{tpu_custom_call.1} parent=1 // pred_check_branch
      %9 = sbr.rel (0) target = $region5
    $region4: #{tpu_custom_call.1} parent=1 // pred_region
      %s11 = ssub.s32 128, 128
      %12 = vsyncadd [#allocation3], %s11
      %s14 = sshll.u32 [#allocation2], 4
      %s15 = int_to_ptr.vmem [resolvable:$true] %s14
      %17 = dma.hbm_to_vmem [thread:$0]  %s0, 128, %s15, [#allocation3]
    $region5: #{tpu_custom_call.1} parent=1 // pred_fallthru
      _
    // Predicated region
    $region6: #{tpu_custom_call.1} parent=1 // pred_check
      _
    $region7: #{tpu_custom_call.1} parent=1 // pred_check_branch
      %19 = sbr.rel (0) target = $region9
    $region8: #{tpu_custom_call.1} parent=1 // pred_region
      %20 = dma.done [#allocation3], 128
    $region9: #{tpu_custom_call.1} parent=1 // pred_fallthru
      _
    %v21 = vld [vmem:[#allocation2] sm:$0xff]
    %v22 = vunpack.c.l.f8e4m3fn %v21
    %v23 = vunpack.c.h.f8e4m3fn %v21
    %v26 = vunpack.c.l.b16 %v22
    %v27 = vunpack.c.h.b16 %v22
    %v28 = vunpack.c.l.b16 %v23
    %v29 = vunpack.c.h.b16 %v23
    %v30 = vpack.c.b16 %v26, %v26
    %v31 = vpack.c.b16 %v27, %v27
    %v32 = vpack.c.b16 %v28, %v28
    %v33 = vpack.c.b16 %v29, %v29
    %38 = vst [vmem:[#allocation5] sm:$0xf] %v30
    %39 = vst [vmem:[#allocation5 + $0x4] sm:$0xf] %v31
    %40 = vst [vmem:[#allocation5 + $0x8] sm:$0xf] %v32
    %41 = vst [vmem:[#allocation5 + $0xc] sm:$0xf] %v33
    // Predicated region
    $region10: #{tpu_custom_call.1} parent=1 // pred_check
      _
    $region11: #{tpu_custom_call.1} parent=1 // pred_check_branch
      %43 = sbr.rel (0) target = $region13
    $region12: #{tpu_custom_call.1} parent=1 // pred_region
      %s45 = ssub.s32 256, 256
      %46 = vsyncadd [#allocation4], %s45
      %s47 = sshll.u32 [#allocation5], 4
      %s48 = int_to_ptr.vmem [resolvable:$true] %s47
      %53 = dma.vmem_to_hbm [thread:$0]  %s48, 256, %s1, [#allocation4], 64, 64, 4
    $region13: #{tpu_custom_call.1} parent=1 // pred_fallthru
      _
    // Predicated region
    $region14: #{tpu_custom_call.1} parent=1 // pred_check
      _
    $region15: #{tpu_custom_call.1} parent=1 // pred_check_branch
      %55 = sbr.rel (0) target = $region17
    $region16: #{tpu_custom_call.1} parent=1 // pred_region
      %56 = dma.done [#allocation4], 256
    $region17: #{tpu_custom_call.1} parent=1 // pred_fallthru
      _
    %57 = vsyncpa [#allocation3], 1
    %58 = vsyncpa [#allocation4], 1

// kernel: _fp8_forward.1
$region0: #{_fp8_forward.1}
  #allocation0 [shape = 'u32[]', space=smem, size = 0x4, offset = 0x4, fixed_abs, tag = 'smem constant byte address 0x4 - core index']
  #allocation1 [shape = 'u32[144,128]{1,0:T(1,128)}', space=vmem, size = 0x12000, scoped, tag = 'internal scratch']
  #allocation2 [shape = 'f32[16,128]{1,0:T(8,128)}', space=vmem, size = 0x2000, scoped, tag = 'scratch operand']
  #allocation3 [shape = 'f32[1]{0:T(128)S(6)}', space=smem, size = 0x200, scoped, tag = 'scoped memory for _fp8_forward.1']
  %s0 = inlined_call_operand.<no memory space> [shape: f32[1], index: 0, kind: input, shape index: {}]
  %s1 = inlined_call_operand.vmem [shape: bf16[16,32], index: 1, kind: input, shape index: {}]
  %s2 = inlined_call_operand.vmem [shape: bf16[32,128], index: 2, kind: input, shape index: {}]
  %s3 = inlined_call_operand.vmem [shape: f32[1,128], index: 3, kind: input, shape index: {}]
  %s4 = inlined_call_operand.vmem [shape: bf16[16,128], index: 4, kind: output, shape index: {}]
  %s5 = sld [smem:[#allocation0]]
  $region34: #{_fp8_forward.1} parent=0
    _
  %s7 = ssub.s32 1, %s5
  %s8 = scalar_select 0, %s7, %s5
  %9 = sst [smem:[#allocation3]] %s0
  // Predicated region
  $region2: #{_fp8_forward.1} parent=0 // pred_check
    _
  $region3: #{_fp8_forward.1} parent=0 // pred_check_branch
    %11 = sbr.rel (0) target = $region5
  $region4: #{_fp8_forward.1} parent=0 // pred_region
    _
  $region5: #{_fp8_forward.1} parent=0 // pred_fallthru
    _
  // Predicated region
  $region6: #{_fp8_forward.1} parent=0 // pred_check
    _
  $region7: #{_fp8_forward.1} parent=0 // pred_check_branch
    %13 = sbr.rel (0) target = $region9
  $region8: #{_fp8_forward.1} parent=0 // pred_region
    _
  $region9: #{_fp8_forward.1} parent=0 // pred_fallthru
    _
  // Predicated region
  $region10: #{_fp8_forward.1} parent=0 // pred_check
    _
  $region11: #{_fp8_forward.1} parent=0 // pred_check_branch
    %15 = sbr.rel (0) target = $region13
  $region12: #{_fp8_forward.1} parent=0 // pred_region
    _
  $region13: #{_fp8_forward.1} parent=0 // pred_fallthru
    _
  // Predicated region
  $region14: #{_fp8_forward.1} parent=0 // pred_check
    _
  $region15: #{_fp8_forward.1} parent=0 // pred_check_branch
    %17 = sbr.rel (0) target = $region17
  $region16: #{_fp8_forward.1} parent=0 // pred_region
    _
  $region17: #{_fp8_forward.1} parent=0 // pred_fallthru
    _
  %p19 = scmp.eq.s32.totalorder 0, 0
  // Predicated region
  $region18: #{_fp8_forward.1} parent=0 // pred_check
    %p20 = pneg %p19
  $region19: #{_fp8_forward.1} parent=0 // pred_check_branch
    %22 = sbr.rel (%p20) target = $region21
  $region20: #{_fp8_forward.1} parent=0 // pred_region
    %23 = vst [vmem:[#allocation2] sm:$0xff] 0.0
    %24 = vst [vmem:[#allocation2 + $0x8] sm:$0xff] 0.0
  $region21: #{_fp8_forward.1} parent=0 // pred_fallthru
    _
  %v25 = vld [vmem:[%s1] sm:$0xf]
  %v26 = vld [vmem:[%s1 + $0x4] sm:$0xf]
  %v27 = vld [vmem:[%s2] sm:$0xf]
  %v28 = vld [vmem:[%s2 + $0x4] sm:$0xf]
  %v29 = vld [vmem:[%s2 + $0x8] sm:$0xf]
  %v30 = vld [vmem:[%s2 + $0xc] sm:$0xf]
  %v31 = vld [vmem:[#allocation2] sm:$0xff]
  %v32 = vld [vmem:[#allocation2 + $0x8] sm:$0xff]
  %v35 = vunpack.c.l.b16 %v25
  %v36 = vunpack.c.l.b16 %v26
  %v37 = vpack.c.b16 %v36, %v35
  %v42 = vunpack.c.l.b16 %v27
  %v43 = vunpack.c.l.b16 %v28
  %v44 = vunpack.c.l.b16 %v29
  %v45 = vunpack.c.l.b16 %v30
  %v46 = vpack.c.b16 %v43, %v42
  %v47 = vpack.c.b16 %v45, %v44
  %vm50 = vcmask 261120
  %v52 = vsel %vm50, %v37, 0
  %54 = vmatprep.subr.bf16.mxu0 0
  %55 = vmatpush1.bf16.msra.mxu0 %v46
  %56 = vmatprep.subr.bf16.mxu0 0
  %57 = vmatpush1.bf16.msra.mxu0 %v47
  %58 = vmatprep.subr.bf16.mxu0 0
  %59 = vmatpush1.bf16.msra.mxu0 0
  %60 = vmatprep.subr.bf16.mxu0 0
  %61 = vmatpush1.bf16.msra.mxu0 0
  %62 = vmatprep.subr.bf16.mxu0 0
  %63 = vmatpush1.bf16.msra.mxu0 0
  %64 = vmatprep.subr.bf16.mxu0 0
  %65 = vmatpush1.bf16.msra.mxu0 0
  %66 = vmatprep.subr.bf16.mxu0 0
  %67 = vmatpush1.bf16.msra.mxu0 0
  %68 = vmatprep.subr.bf16.mxu0 0
  %69 = vmatpush1.bf16.msra.mxu0 0
  %70 = vmatprep.subr.bf16.mxu0 0
  %71 = vmatpush1.bf16.msra.mxu0 0
  %72 = vmatprep.subr.bf16.mxu0 0
  %73 = vmatpush1.bf16.msra.mxu0 0
  %74 = vmatprep.subr.bf16.mxu0 0
  %75 = vmatpush1.bf16.msra.mxu0 0
  %76 = vmatprep.subr.bf16.mxu0 0
  %77 = vmatpush1.bf16.msra.mxu0 0
  %78 = vmatprep.subr.bf16.mxu0 0
  %79 = vmatpush1.bf16.msra.mxu0 0
  %80 = vmatprep.subr.bf16.mxu0 0
  %81 = vmatpush1.bf16.msra.mxu0 0
  %82 = vmatprep.subr.bf16.mxu0 0
  %83 = vmatpush1.bf16.msra.mxu0 0
  %84 = vmatprep.subr.bf16.mxu0 0
  %85 = vmatpush1.bf16.msra.mxu0 0
  %86 = vmatprep.mubr.bf16.mxu0 0
  %87 = vmatmul.mubr.bf16.gmra.mrb[0].mxu0 %v52
  %v88 = vpop.f32.mrb[0].mxu0
  %v89 = vadd.f32 0.0, %v88
  %v90 = vpop.f32.mrb[0].mxu0
  %v91 = vpop.f32.mrb[0].mxu0
  %v92 = vadd.f32 0.0, %v91
  %v93 = vpop.f32.mrb[0].mxu0
  %94 = vdwg.mxu0
  %v95 = vadd.f32 %v31, %v89
  %v96 = vadd.f32 %v32, %v92
  %97 = vst [vmem:[#allocation2] sm:$0xff] %v95
  %98 = vst [vmem:[#allocation2 + $0x8] sm:$0xff] %v96
  // Predicated region
  $region22: #{_fp8_forward.1} parent=0 // pred_check
    %p99 = pneg %p19
  $region23: #{_fp8_forward.1} parent=0 // pred_check_branch
    %101 = sbr.rel (%p99) target = $region25
  $region24: #{_fp8_forward.1} parent=0 // pred_region
    %v102 = vld [vmem:[#allocation2] sm:$0xff]
    %v103 = vld [vmem:[#allocation2 + $0x8] sm:$0xff]
    %s104 = sld [smem:[#allocation3]]
    %v105 = vstv %s104
    %v106 = vmul.f32 %v102, %v105
    %v107 = vmul.f32 %v103, %v105
    %v108 = vld [vmem:[%s3] sm:$0x1]
    %v110 = vlaneseq
    %v111 = vshrl.u32 %v110, 7
    %v112 = vsub.s32 0, %v111
    %v113 = vrot.slane %v108, %v112
    %v115 = vadd.f32 %v106, %v113
    %v116 = vadd.f32 %v107, %v113
    %v117 = vpack.c.bf16 %v116, %v115
    %v119 = vunpack.c.l.b16 %v117
    %v120 = vunpack.c.h.b16 %v117
    %v121 = vpack.c.b16 %v119, %v119
    %v122 = vpack.c.b16 %v120, %v120
    %125 = vst [vmem:[%s4] sm:$0xf] %v121
    %126 = vst [vmem:[%s4 + $0x4] sm:$0xf] %v122
  $region25: #{_fp8_forward.1} parent=0 // pred_fallthru
    _
  // Predicated region
  $region26: #{_fp8_forward.1} parent=0 // pred_check
    _
  $region27: #{_fp8_forward.1} parent=0 // pred_check_branch
    %128 = sbr.rel (0) target = $region29
  $region28: #{_fp8_forward.1} parent=0 // pred_region
    _
  $region29: #{_fp8_forward.1} parent=0 // pred_fallthru
    _
  // Predicated region
  $region30: #{_fp8_forward.1} parent=0 // pred_check
    _
  $region31: #{_fp8_forward.1} parent=0 // pred_check_branch
    %130 = sbr.rel (0) target = $region33
  $region32: #{_fp8_forward.1} parent=0 // pred_region
    _
  $region33: #{_fp8_forward.1} parent=0 // pred_fallthru
    _

</llo_original>
